<compile_context>
chip_gen: v7x
topology: tpu7x:2x2x1
jax: 0.10.0
libtpu: 0.0.40
codegen_flags: <defaults>
</compile_context>

<pallas_src>
import jax
import jax.numpy as jnp
import numpy as np
from jax.experimental import pallas as pl
from jax.experimental.pallas import tpu as pltpu

# Tap offsets (kh, kw) of the 5 one-hot 3x3 filters: output channel o reads
# input[h + kh - 1, w + kw - 1], clamped to the image (== replication padding).
_TAPS = ((0, 0), (1, 1), (2, 2), (2, 0), (0, 2))


def propagation_prob_kernel(x_ref, o_ref):
    # x_ref: (1, Dt, H, W)      one (batch, depth-tile) slab of the prob volume
    # o_ref: (1, 5, Dt, H, W)   5 edge-clamp-shifted copies
    x = x_ref[0]  # (Dt, H, W)

    # Edge-clamped row shifts (sublane axis):
    #   up[h] = x[max(h-1, 0)],  dn[h] = x[min(h+1, H-1)]
    up = jnp.concatenate([x[:, :1, :], x[:, :-1, :]], axis=1)
    dn = jnp.concatenate([x[:, 1:, :], x[:, -1:, :]], axis=1)

    # Edge-clamped column shifts (lane axis).
    def shl(v):  # v[..., max(w-1, 0)]
        return jnp.concatenate([v[:, :, :1], v[:, :, :-1]], axis=2)

    def shr(v):  # v[..., min(w+1, W-1)]
        return jnp.concatenate([v[:, :, 1:], v[:, :, -1:]], axis=2)

    o_ref[0, 0, :, :, :] = shl(up)   # tap (0,0): input[h-1, w-1]
    o_ref[0, 1, :, :, :] = x         # tap (1,1): input[h,   w  ]
    o_ref[0, 2, :, :, :] = shr(dn)   # tap (2,2): input[h+1, w+1]
    o_ref[0, 3, :, :, :] = shl(dn)   # tap (2,0): input[h+1, w-1]
    o_ref[0, 4, :, :, :] = shr(up)   # tap (0,2): input[h-1, w+1]


def _pick_d_tile(D, H, W, itemsize, budget_bytes=8 * 1024 * 1024):
    # Per grid step (double-buffered): input (Dt,H,W) + output (5,Dt,H,W) -> 2*6*Dt*H*W.
    for dt in range(D, 0, -1):
        if D % dt == 0 and 2 * 6 * dt * H * W * itemsize <= budget_bytes:
            return dt
    return 1


def propagation_prob(prob_volume):
    """prob_volume: (N, 1, D, H, W) -> (N, 5, D, H, W), matching the PyTorch module."""
    N, C, D, H, W = prob_volume.shape
    assert C == 1, "conv3d filter has in_channels=1, so the input must have 1 channel"
    x = prob_volume.reshape(N, D, H, W)  # free: drop the size-1 channel dim

    dt = _pick_d_tile(D, H, W, x.dtype.itemsize)
    grid = (N, D // dt)

    itemsize = x.dtype.itemsize
    cost = pl.CostEstimate(
        flops=2 * N * 5 * D * H * W * 9,          # nominal conv3d FLOPs
        transcendentals=0,
        bytes_accessed=(1 + 5) * N * D * H * W * itemsize,  # read 1x, write 5x
    )

    out = pl.pallas_call(
        propagation_prob_kernel,
        out_shape=jax.ShapeDtypeStruct((N, 5, D, H, W), prob_volume.dtype),
        grid_spec=pltpu.PrefetchScalarGridSpec(
            num_scalar_prefetch=0,
            grid=grid,
            in_specs=[pl.BlockSpec((1, dt, H, W), lambda n, d: (n, d, 0, 0))],
            out_specs=pl.BlockSpec((1, 5, dt, H, W), lambda n, d: (n, 0, d, 0, 0)),
        ),
        compiler_params=pltpu.CompilerParams(
            dimension_semantics=("parallel", "parallel")),
        cost_estimate=cost,
    )(x)
    return out


def _reference(prob_volume):
    # Mirrors ReplicationPad3d((1,1,1,1,0,0)) + conv3d(one_hot_filter, padding=0) exactly.
    N, C, D, H, W = prob_volume.shape
    xp = jnp.pad(prob_volume, ((0, 0), (0, 0), (0, 0), (1, 1), (1, 1)), mode="edge")
    outs = [xp[:, 0, :, kh:kh + H, kw:kw + W] for kh, kw in _TAPS]
    return jnp.stack(outs, axis=1)  # (N, 5, D, H, W)


if __name__ == "__main__":
    key = jax.random.PRNGKey(0)
    N, C, D, H, W = 2, 1, 4, 16, 16
    prob_volume = jax.random.uniform(key, (N, C, D, H, W), dtype=jnp.float32)

    out = propagation_prob(prob_volume)
    out = jax.block_until_ready(out)

    ref = _reference(prob_volume)
    assert out.shape == (N, 5, D, H, W)
    assert np.allclose(np.asarray(out), np.asarray(ref), atol=1e-6, rtol=1e-6)

    print("KERNEL_OK")
</pallas_src>

<mosaic_0001>
module attributes {stable_mosaic.version = 11 : i64} {
  func.func @propagation_prob_kernel(%arg0: i32, %arg1: i32, %arg2: memref<1x4x16x16xf32, #tpu.memory_space<vmem>>, %arg3: memref<1x5x4x16x16xf32, #tpu.memory_space<vmem>>) attributes {dimension_semantics = [#tpu.dimension_semantics<parallel>, #tpu.dimension_semantics<parallel>], iteration_bounds = array<i64: 2, 1>, scalar_prefetch = 0 : i64, scratch_operands = 0 : i64, tpu.core_type = #tpu.core_type<tc>, window_params = [{transform_indices = @transform_0, window_bounds = array<i64: 1, 4, 16, 16>}, {transform_indices = @transform_1, window_bounds = array<i64: 1, 5, 4, 16, 16>}]} {
    %c0 = arith.constant 0 : index
    %c0_0 = arith.constant 0 : index
    %c0_1 = arith.constant 0 : index
    %c0_2 = arith.constant 0 : index
    %0 = vector.load %arg2[%c0, %c0_0, %c0_1, %c0_2] : memref<1x4x16x16xf32, #tpu.memory_space<vmem>>, vector<1x4x16x16xf32>
    %1 = vector.shape_cast %0 : vector<1x4x16x16xf32> to vector<4x16x16xf32>
    %2 = vector.extract_strided_slice %1 {offsets = [0, 0, 0], sizes = [4, 1, 16], strides = [1, 1, 1]} : vector<4x16x16xf32> to vector<4x1x16xf32>
    %3 = vector.extract_strided_slice %1 {offsets = [0, 0, 0], sizes = [4, 15, 16], strides = [1, 1, 1]} : vector<4x16x16xf32> to vector<4x15x16xf32>
    %4 = tpu.concatenate %2, %3 in 1 : vector<4x1x16xf32>, vector<4x15x16xf32> -> vector<4x16x16xf32>
    %5 = vector.extract_strided_slice %1 {offsets = [0, 1, 0], sizes = [4, 15, 16], strides = [1, 1, 1]} : vector<4x16x16xf32> to vector<4x15x16xf32>
    %6 = vector.extract_strided_slice %1 {offsets = [0, 15, 0], sizes = [4, 1, 16], strides = [1, 1, 1]} : vector<4x16x16xf32> to vector<4x1x16xf32>
    %7 = tpu.concatenate %5, %6 in 1 : vector<4x15x16xf32>, vector<4x1x16xf32> -> vector<4x16x16xf32>
    %8 = vector.extract_strided_slice %4 {offsets = [0, 0, 0], sizes = [4, 16, 1], strides = [1, 1, 1]} : vector<4x16x16xf32> to vector<4x16x1xf32>
    %9 = vector.extract_strided_slice %4 {offsets = [0, 0, 0], sizes = [4, 16, 15], strides = [1, 1, 1]} : vector<4x16x16xf32> to vector<4x16x15xf32>
    %10 = tpu.concatenate %8, %9 in 2 : vector<4x16x1xf32>, vector<4x16x15xf32> -> vector<4x16x16xf32>
    %c0_3 = arith.constant 0 : index
    %c0_4 = arith.constant 0 : index
    %c0_5 = arith.constant 0 : index
    %c0_6 = arith.constant 0 : index
    %c0_7 = arith.constant 0 : index
    %11 = vector.load %arg3[%c0_3, %c0_4, %c0_5, %c0_6, %c0_7] : memref<1x5x4x16x16xf32, #tpu.memory_space<vmem>>, vector<1x1x4x16x16xf32>
    %12 = vector.shape_cast %11 : vector<1x1x4x16x16xf32> to vector<4x16x16xf32>
    %13 = vector.shape_cast %10 : vector<4x16x16xf32> to vector<1x1x4x16x16xf32>
    tpu.vector_store %arg3[%c0_3, %c0_4, %c0_5, %c0_6, %c0_7], %13 {strides = array<i32>} : memref<1x5x4x16x16xf32, #tpu.memory_space<vmem>>, vector<1x1x4x16x16xf32>,
    %c0_8 = arith.constant 0 : index
    %c1 = arith.constant 1 : index
    %c0_9 = arith.constant 0 : index
    %c0_10 = arith.constant 0 : index
    %c0_11 = arith.constant 0 : index
    %14 = vector.load %arg3[%c0_8, %c1, %c0_9, %c0_10, %c0_11] : memref<1x5x4x16x16xf32, #tpu.memory_space<vmem>>, vector<1x1x4x16x16xf32>
    %15 = vector.shape_cast %14 : vector<1x1x4x16x16xf32> to vector<4x16x16xf32>
    %16 = vector.shape_cast %1 : vector<4x16x16xf32> to vector<1x1x4x16x16xf32>
    tpu.vector_store %arg3[%c0_8, %c1, %c0_9, %c0_10, %c0_11], %16 {strides = array<i32>} : memref<1x5x4x16x16xf32, #tpu.memory_space<vmem>>, vector<1x1x4x16x16xf32>,
    %17 = vector.extract_strided_slice %7 {offsets = [0, 0, 1], sizes = [4, 16, 15], strides = [1, 1, 1]} : vector<4x16x16xf32> to vector<4x16x15xf32>
    %18 = vector.extract_strided_slice %7 {offsets = [0, 0, 15], sizes = [4, 16, 1], strides = [1, 1, 1]} : vector<4x16x16xf32> to vector<4x16x1xf32>
    %19 = tpu.concatenate %17, %18 in 2 : vector<4x16x15xf32>, vector<4x16x1xf32> -> vector<4x16x16xf32>
    %c0_12 = arith.constant 0 : index
    %c2 = arith.constant 2 : index
    %c0_13 = arith.constant 0 : index
    %c0_14 = arith.constant 0 : index
    %c0_15 = arith.constant 0 : index
    %20 = vector.load %arg3[%c0_12, %c2, %c0_13, %c0_14, %c0_15] : memref<1x5x4x16x16xf32, #tpu.memory_space<vmem>>, vector<1x1x4x16x16xf32>
    %21 = vector.shape_cast %20 : vector<1x1x4x16x16xf32> to vector<4x16x16xf32>
    %22 = vector.shape_cast %19 : vector<4x16x16xf32> to vector<1x1x4x16x16xf32>
    tpu.vector_store %arg3[%c0_12, %c2, %c0_13, %c0_14, %c0_15], %22 {strides = array<i32>} : memref<1x5x4x16x16xf32, #tpu.memory_space<vmem>>, vector<1x1x4x16x16xf32>,
    %23 = vector.extract_strided_slice %7 {offsets = [0, 0, 0], sizes = [4, 16, 1], strides = [1, 1, 1]} : vector<4x16x16xf32> to vector<4x16x1xf32>
    %24 = vector.extract_strided_slice %7 {offsets = [0, 0, 0], sizes = [4, 16, 15], strides = [1, 1, 1]} : vector<4x16x16xf32> to vector<4x16x15xf32>
    %25 = tpu.concatenate %23, %24 in 2 : vector<4x16x1xf32>, vector<4x16x15xf32> -> vector<4x16x16xf32>
    %c0_16 = arith.constant 0 : index
    %c3 = arith.constant 3 : index
    %c0_17 = arith.constant 0 : index
    %c0_18 = arith.constant 0 : index
    %c0_19 = arith.constant 0 : index
    %26 = vector.load %arg3[%c0_16, %c3, %c0_17, %c0_18, %c0_19] : memref<1x5x4x16x16xf32, #tpu.memory_space<vmem>>, vector<1x1x4x16x16xf32>
    %27 = vector.shape_cast %26 : vector<1x1x4x16x16xf32> to vector<4x16x16xf32>
    %28 = vector.shape_cast %25 : vector<4x16x16xf32> to vector<1x1x4x16x16xf32>
    tpu.vector_store %arg3[%c0_16, %c3, %c0_17, %c0_18, %c0_19], %28 {strides = array<i32>} : memref<1x5x4x16x16xf32, #tpu.memory_space<vmem>>, vector<1x1x4x16x16xf32>,
    %29 = vector.extract_strided_slice %4 {offsets = [0, 0, 1], sizes = [4, 16, 15], strides = [1, 1, 1]} : vector<4x16x16xf32> to vector<4x16x15xf32>
    %30 = vector.extract_strided_slice %4 {offsets = [0, 0, 15], sizes = [4, 16, 1], strides = [1, 1, 1]} : vector<4x16x16xf32> to vector<4x16x1xf32>
    %31 = tpu.concatenate %29, %30 in 2 : vector<4x16x15xf32>, vector<4x16x1xf32> -> vector<4x16x16xf32>
    %c0_20 = arith.constant 0 : index
    %c4 = arith.constant 4 : index
    %c0_21 = arith.constant 0 : index
    %c0_22 = arith.constant 0 : index
    %c0_23 = arith.constant 0 : index
    %32 = vector.load %arg3[%c0_20, %c4, %c0_21, %c0_22, %c0_23] : memref<1x5x4x16x16xf32, #tpu.memory_space<vmem>>, vector<1x1x4x16x16xf32>
    %33 = vector.shape_cast %32 : vector<1x1x4x16x16xf32> to vector<4x16x16xf32>
    %34 = vector.shape_cast %31 : vector<4x16x16xf32> to vector<1x1x4x16x16xf32>
    tpu.vector_store %arg3[%c0_20, %c4, %c0_21, %c0_22, %c0_23], %34 {strides = array<i32>} : memref<1x5x4x16x16xf32, #tpu.memory_space<vmem>>, vector<1x1x4x16x16xf32>,
    return
  }
  func.func @transform_0(%arg0: i32, %arg1: i32) -> (i32, i32, i32, i32) {
    %c0_i32 = arith.constant 0 : i32
    %c0_i32_0 = arith.constant 0 : i32
    %c0_i32_1 = arith.constant 0 : i32
    return %arg0, %arg1, %c0_i32, %c0_i32_0 : i32, i32, i32, i32
  }
  func.func @transform_1(%arg0: i32, %arg1: i32) -> (i32, i32, i32, i32, i32) {
    %c0_i32 = arith.constant 0 : i32
    %c0_i32_0 = arith.constant 0 : i32
    %c0_i32_1 = arith.constant 0 : i32
    %c0_i32_2 = arith.constant 0 : i32
    return %arg0, %c0_i32, %arg1, %c0_i32_0, %c0_i32_1 : i32, i32, i32, i32, i32
  }
}

</mosaic_0001>

<llo_original>
// kernel: tpu_custom_call.1
$region0: #{tpu_custom_call.1}
  #allocation0 [shape = 'u32[]', space=smem, size = 0x4, offset = 0x4, fixed_abs, tag = 'smem constant byte address 0x4 - core index']
  #allocation1 [shape = 'u32[144,128]{1,0:T(1,128)}', space=vmem, size = 0x12000, scoped, tag = 'internal scratch']
  %s0 = inlined_call_operand.hbm [shape: f32[2,4,16,16], index: 0, kind: input, shape index: {}]
  %s1 = inlined_call_operand.hbm [shape: f32[2,5,4,16,16], index: 1, kind: output, shape index: {}]
  %s2 = sld [smem:[#allocation0]]
  $region41: #{tpu_custom_call.1} parent=0
    _
  %s4 = ssub.s32 1, %s2
  %s5 = scalar_select 0, %s4, %s2
  $region1: #{tpu_custom_call.1} parent=0
    #allocation2 [shape = 'u8[65536]{0}', space=vmem, size = 0x10000, scoped, tag = 'input window, operand 0']
    #allocation3 [shape = 's32[2]{0}', space=sflag, size = 0x8, scoped, tag = 'scoped memory for tpu_custom_call.1']
    #allocation4 [shape = 's32[2]{0}', space=sflag, size = 0x8, scoped, tag = 'scoped memory for tpu_custom_call.1']
    #allocation5 [shape = 'u8[327680]{0}', space=vmem, size = 0x50000, scoped, tag = 'output window, operand 0']
    %6 = vsyncpa [#allocation3], 0
    %s7 = scalar_lea.sflag [#allocation3], 1
    %8 = vsyncpa %s7, 0
    %9 = vsyncpa [#allocation4], 0
    %s10 = scalar_lea.sflag [#allocation4], 1
    %11 = vsyncpa %s10, 0
    loop: start=0, step=1, limit=4
    $region2: #{tpu_custom_call.1} parent=1 // loop_pre_header
      _
    $region3: #{tpu_custom_call.1} parent=1 // loop_header
      %s13 = sphi 0, %s17
      %p14 = scmp.ge.s32.totalorder %s13, 4
      %s20 = sphi 0, %s32
      %s21 = sphi 0, %s28
      %s22 = sphi 0, %s20
      %s23 = sphi 0, %s21
      %s24 = sphi 0, %s22
      %s25 = sphi 0, %s23
      %s37 = sphi 0, %s39
      %s40 = sphi 0, %s37
      %s41 = sphi 0, %s40
      %s57 = sphi 0, %s41
      %s65 = sphi 0, %s67
      %s68 = sphi 0, %s65
      %s69 = sphi 0, %s68
      %s85 = sphi 0, %s69
    $region4: #{tpu_custom_call.1} parent=1 // loop_header_branch
      %16 = sbr.rel (%p14) target = $region8
    $region5: #{tpu_custom_call.1} parent=1 // loop_body
      %s18 = ssub.s32 %s13, 1
      %s19 = ssub.s32 %s13, 2
      %s26 = sadd.s32 1, %s21
      %p27 = scmp.ge.s32.totalorder %s26, 1
      %s28 = scalar_select %p27, 0, %s26
      %s29 = sadd.s32 1, %s20
      %s30 = scalar_select %p27, %s29, %s20
      %p31 = scmp.ge.s32.totalorder %s30, 2
      %s32 = scalar_select %p31, 0, %s30
      %s33 = ssub.s32 %s20, %s32
      %s34 = ssub.s32 %s21, %s28
      %s35 = sor.u32 %s33, %s34
      %p36 = scmp.eq.s32.totalorder %s35, 0
      %s38 = sadd.s32 %s37, 1
      %s39 = scalar_select %p36, %s37, %s38
      %p42 = pneg %p36
      %p43 = scmp.eq.s32.totalorder %s13, 1
      %p44 = por %p42, %p43
      %p45 = scmp.ne.s32.totalorder %s37, %s40
      %p46 = scmp.eq.s32.totalorder %s13, 0
      %p47 = por %p45, %p46
      %p48 = scmp.ne.s32.totalorder %s37, %s40
      %p49 = scmp.eq.s32.totalorder %s18, 1
      %p50 = por %p48, %p49
      %p51 = scmp.ne.s32.totalorder %s40, %s41
      %p52 = scmp.eq.s32.totalorder %s18, 0
      %p53 = por %p51, %p52
      %p54 = scmp.ne.s32.totalorder %s40, %s41
      %p55 = scmp.eq.s32.totalorder %s19, 1
      %p56 = por %p54, %p55
      %p58 = scmp.ne.s32.totalorder %s41, %s57
      %p59 = scmp.eq.s32.totalorder %s19, 0
      %p60 = por %p58, %p59
      %s61 = ssub.s32 %s20, %s32
      %s62 = ssub.s32 %s21, %s28
      %s63 = sor.u32 %s61, %s62
      %p64 = scmp.eq.s32.totalorder %s63, 0
      %s66 = sadd.s32 %s65, 1
      %s67 = scalar_select %p64, %s65, %s66
      %p70 = pneg %p64
      %p71 = scmp.eq.s32.totalorder %s13, 1
      %p72 = por %p70, %p71
      %p73 = scmp.ne.s32.totalorder %s65, %s68
      %p74 = scmp.eq.s32.totalorder %s13, 0
      %p75 = por %p73, %p74
      %p76 = scmp.ne.s32.totalorder %s65, %s68
      %p77 = scmp.eq.s32.totalorder %s18, 1
      %p78 = por %p76, %p77
      %p79 = scmp.ne.s32.totalorder %s68, %s69
      %p80 = scmp.eq.s32.totalorder %s18, 0
      %p81 = por %p79, %p80
      %p82 = scmp.ne.s32.totalorder %s68, %s69
      %p83 = scmp.eq.s32.totalorder %s19, 1
      %p84 = por %p82, %p83
      %p86 = scmp.ne.s32.totalorder %s69, %s85
      %p87 = scmp.eq.s32.totalorder %s19, 0
      %p88 = por %p86, %p87
      %p89 = scmp.le.s32.totalorder 1, %s13
      %p90 = scmp.lt.s32.totalorder %s13, 3
      %p91 = pnand %p89, %p90
      %p92 = pneg %p91
      // Predicated region
      $region9: #{tpu_custom_call.1} parent=5 // pred_check
        _
      $region10: #{tpu_custom_call.1} parent=5 // pred_check_branch
        %94 = sbr.rel (%p91) target = $region12
      $region11: #{tpu_custom_call.1} parent=5 // pred_region
        %s95 = ssub.s32 %s13, 1
      $region12: #{tpu_custom_call.1} parent=5 // pred_fallthru
        _
      %p96 = scmp.lt.s32.totalorder %s13, 2
      // Predicated region
      $region13: #{tpu_custom_call.1} parent=5 // pred_check
        %p97 = pneg %p96
      $region14: #{tpu_custom_call.1} parent=5 // pred_check_branch
        %99 = sbr.rel (%p97) target = $region16
      $region15: #{tpu_custom_call.1} parent=5 // pred_region
        // Predicated region
        $region17: #{tpu_custom_call.1} parent=15 // pred_check
          %p100 = pneg %p47
        $region18: #{tpu_custom_call.1} parent=15 // pred_check_branch
          %102 = sbr.rel (%p100) target = $region20
        $region19: #{tpu_custom_call.1} parent=15 // pred_region
          %s103 = sand.u32 %s37, 1
          %s104 = scalar_lea.sflag [#allocation3], %s103
          %s105 = sand.u32 %s37, 1
          %s106 = smul.addr %s105, 64
          %s107 = scalar_lea.vmem [#allocation2], %s106
          %s108 = smul.u32 4, %s21
          %s110 = ssub.s32 1024, 1024
          %111 = vsyncadd %s104, %s110
          %s112 = smul.addr %s108, 2
          %s113 = smul.addr %s20, 8
          %s114 = sadd.s32 %s112, %s113
          %s115 = smul.addr %s114, 128
          %s116 = scalar_lea.hbm %s0, %s115
          %s117 = sshll.u32 %s107, 4
          %s118 = int_to_ptr.vmem [resolvable:$true] %s117
          %123 = dma.hbm_to_vmem [thread:$0]  %s116, 1024, %s118, %s104, 128, 128, 8
        $region20: #{tpu_custom_call.1} parent=15 // pred_fallthru
          _
      $region16: #{tpu_custom_call.1} parent=5 // pred_fallthru
        _
      %p124 = scmp.le.s32.totalorder 1, %s13
      %p125 = scmp.lt.s32.totalorder %s13, 3
      %p126 = pnand %p124, %p125
      %p127 = pneg %p126
      // Predicated region
      $region21: #{tpu_custom_call.1} parent=5 // pred_check
        _
      $region22: #{tpu_custom_call.1} parent=5 // pred_check_branch
        %129 = sbr.rel (%p126) target = $region24
      $region23: #{tpu_custom_call.1} parent=5 // pred_region
        %s130 = ssub.s32 %s13, 1
        %s131 = sand.u32 %s40, 1
        %s132 = scalar_lea.sflag [#allocation3], %s131
        %s133 = sand.u32 %s40, 1
        %s134 = smul.addr %s133, 64
        %s135 = scalar_lea.vmem [#allocation2], %s134
        // Predicated region
        $region25: #{tpu_custom_call.1} parent=23 // pred_check
          %p136 = pneg %p53
        $region26: #{tpu_custom_call.1} parent=23 // pred_check_branch
          %138 = sbr.rel (%p136) target = $region28
        $region27: #{tpu_custom_call.1} parent=23 // pred_region
          %139 = dma.done %s132, 1024
        $region28: #{tpu_custom_call.1} parent=23 // pred_fallthru
          _
        %s140 = sand.u32 %s40, 1
        %s141 = scalar_lea.sflag [#allocation3], %s140
        %s142 = sand.u32 %s40, 1
        %s143 = smul.addr %s142, 64
        %s144 = scalar_lea.vmem [#allocation2], %s143
        %p145 = pneg %p53
        %p146 = pneg %p50
        %p147 = pneg %p81
        %p148 = pneg %p78
        %s149 = sand.u32 %s68, 1
        %s150 = scalar_lea.sflag [#allocation4], %s149
        %s151 = sand.u32 %s68, 1
        %s152 = smul.addr %s151, 320
        %s153 = scalar_lea.vmem [#allocation5], %s152
        %s154 = smul.u32 4, %s23
        %s155 = smul.u32 4, %s23
        %v156 = vld [vmem:[%s135] sm:$0xff]
        %v157 = vld [vmem:[%s135 + $0x8] sm:$0xff]
        %v158 = vld [vmem:[%s135 + $0x10] sm:$0xff]
        %v159 = vld [vmem:[%s135 + $0x18] sm:$0xff]
        %v160 = vld [vmem:[%s135 + $0x20] sm:$0xff]
        %v161 = vld [vmem:[%s135 + $0x28] sm:$0xff]
        %v162 = vld [vmem:[%s135 + $0x30] sm:$0xff]
        %v163 = vld [vmem:[%s135 + $0x38] sm:$0xff]
        %vm172 = vcmask 1040384
        %v173 = vrot.slane %v156, 7
        %v174 = vrot.slane %v157, 7
        %v175 = vsel %vm172, %v173, %v174
        %v176 = vrot.slane %v158, 7
        %v177 = vrot.slane %v159, 7
        %v178 = vsel %vm172, %v176, %v177
        %v179 = vrot.slane %v160, 7
        %v180 = vrot.slane %v161, 7
        %v181 = vsel %vm172, %v179, %v180
        %v182 = vrot.slane %v162, 7
        %v183 = vrot.slane %v163, 7
        %v184 = vsel %vm172, %v182, %v183
        %v193 = vsel %vm172, %v156, %v173
        %v194 = vsel %vm172, %v158, %v176
        %v195 = vsel %vm172, %v160, %v179
        %v196 = vsel %vm172, %v162, %v182
        %vm197 = vcmask 1046528
        %v198 = vrot.slane %v156, 1
        %v199 = vrot.slane %v157, 1
        %v200 = vsel %vm197, %v198, %v199
        %v201 = vrot.slane %v158, 1
        %v202 = vrot.slane %v159, 1
        %v203 = vsel %vm197, %v201, %v202
        %v204 = vrot.slane %v160, 1
        %v205 = vrot.slane %v161, 1
        %v206 = vsel %vm197, %v204, %v205
        %v207 = vrot.slane %v162, 1
        %v208 = vrot.slane %v163, 1
        %v209 = vsel %vm197, %v207, %v208
        %v218 = vsel %vm197, %v199, %v157
        %v219 = vsel %vm197, %v202, %v159
        %v220 = vsel %vm197, %v205, %v161
        %v221 = vsel %vm197, %v208, %v163
        %226 = vrot.lane.b32.xlu0 %v193, 1
        %v227 = vpop.permute.xlu0 %226
        %228 = vrot.lane.b32.xlu0 %v175, 1
        %v229 = vpop.permute.xlu0 %228
        %230 = vrot.lane.b32.xlu0 %v194, 1
        %v231 = vpop.permute.xlu0 %230
        %232 = vrot.lane.b32.xlu0 %v178, 1
        %v233 = vpop.permute.xlu0 %232
        %234 = vrot.lane.b32.xlu0 %v195, 1
        %v235 = vpop.permute.xlu0 %234
        %236 = vrot.lane.b32.xlu0 %v181, 1
        %v237 = vpop.permute.xlu0 %236
        %238 = vrot.lane.b32.xlu0 %v196, 1
        %v239 = vpop.permute.xlu0 %238
        %240 = vrot.lane.b32.xlu0 %v184, 1
        %v241 = vpop.permute.xlu0 %240
        %vm250 = vcmask 7168
        %v251 = vsel %vm250, %v193, %v227
        %v252 = vsel %vm250, %v175, %v229
        %v253 = vsel %vm250, %v194, %v231
        %v254 = vsel %vm250, %v178, %v233
        %v255 = vsel %vm250, %v195, %v235
        %v256 = vsel %vm250, %v181, %v237
        %v257 = vsel %vm250, %v196, %v239
        %v258 = vsel %vm250, %v184, %v241
        %vm259 = vcmask 130048
        %260 = vst.msk [vmem:[%s153] sm:$0xff] %vm259, %v251
        %261 = vst.msk [vmem:[%s153 + $0x8] sm:$0xff] %vm259, %v252
        %262 = vst.msk [vmem:[%s153 + $0x10] sm:$0xff] %vm259, %v253
        %263 = vst.msk [vmem:[%s153 + $0x18] sm:$0xff] %vm259, %v254
        %264 = vst.msk [vmem:[%s153 + $0x20] sm:$0xff] %vm259, %v255
        %265 = vst.msk [vmem:[%s153 + $0x28] sm:$0xff] %vm259, %v256
        %266 = vst.msk [vmem:[%s153 + $0x30] sm:$0xff] %vm259, %v257
        %267 = vst.msk [vmem:[%s153 + $0x38] sm:$0xff] %vm259, %v258
        %s268 = scalar_lea.vmem %s153, 64 [#allocation5]
        %269 = vst.msk [vmem:[%s268] sm:$0xff] %vm259, %v156
        %270 = vst.msk [vmem:[%s268 + $0x8] sm:$0xff] %vm259, %v157
        %271 = vst.msk [vmem:[%s268 + $0x10] sm:$0xff] %vm259, %v158
        %272 = vst.msk [vmem:[%s268 + $0x18] sm:$0xff] %vm259, %v159
        %273 = vst.msk [vmem:[%s268 + $0x20] sm:$0xff] %vm259, %v160
        %274 = vst.msk [vmem:[%s268 + $0x28] sm:$0xff] %vm259, %v161
        %275 = vst.msk [vmem:[%s268 + $0x30] sm:$0xff] %vm259, %v162
        %276 = vst.msk [vmem:[%s268 + $0x38] sm:$0xff] %vm259, %v163
        %281 = vrot.lane.b32.xlu0 %v200, 127
        %v282 = vpop.permute.xlu0 %281
        %283 = vrot.lane.b32.xlu0 %v218, 127
        %v284 = vpop.permute.xlu0 %283
        %285 = vrot.lane.b32.xlu0 %v203, 127
        %v286 = vpop.permute.xlu0 %285
        %287 = vrot.lane.b32.xlu0 %v219, 127
        %v288 = vpop.permute.xlu0 %287
        %289 = vrot.lane.b32.xlu0 %v206, 127
        %v290 = vpop.permute.xlu0 %289
        %291 = vrot.lane.b32.xlu0 %v220, 127
        %v292 = vpop.permute.xlu0 %291
        %293 = vrot.lane.b32.xlu0 %v209, 127
        %v294 = vpop.permute.xlu0 %293
        %295 = vrot.lane.b32.xlu0 %v221, 127
        %v296 = vpop.permute.xlu0 %295
        %vm305 = vcmask 121856
        %v306 = vsel %vm305, %v282, %v200
        %v307 = vsel %vm305, %v284, %v218
        %v308 = vsel %vm305, %v286, %v203
        %v309 = vsel %vm305, %v288, %v219
        %v310 = vsel %vm305, %v290, %v206
        %v311 = vsel %vm305, %v292, %v220
        %v312 = vsel %vm305, %v294, %v209
        %v313 = vsel %vm305, %v296, %v221
        %s314 = scalar_lea.vmem %s153, 128 [#allocation5]
        %315 = vst.msk [vmem:[%s314] sm:$0xff] %vm259, %v306
        %316 = vst.msk [vmem:[%s314 + $0x8] sm:$0xff] %vm259, %v307
        %317 = vst.msk [vmem:[%s314 + $0x10] sm:$0xff] %vm259, %v308
        %318 = vst.msk [vmem:[%s314 + $0x18] sm:$0xff] %vm259, %v309
        %319 = vst.msk [vmem:[%s314 + $0x20] sm:$0xff] %vm259, %v310
        %320 = vst.msk [vmem:[%s314 + $0x28] sm:$0xff] %vm259, %v311
        %321 = vst.msk [vmem:[%s314 + $0x30] sm:$0xff] %vm259, %v312
        %322 = vst.msk [vmem:[%s314 + $0x38] sm:$0xff] %vm259, %v313
        %323 = vrot.lane.b32.xlu0 %v200, 1
        %v324 = vpop.permute.xlu0 %323
        %325 = vrot.lane.b32.xlu0 %v218, 1
        %v326 = vpop.permute.xlu0 %325
        %327 = vrot.lane.b32.xlu0 %v203, 1
        %v328 = vpop.permute.xlu0 %327
        %329 = vrot.lane.b32.xlu0 %v219, 1
        %v330 = vpop.permute.xlu0 %329
        %331 = vrot.lane.b32.xlu0 %v206, 1
        %v332 = vpop.permute.xlu0 %331
        %333 = vrot.lane.b32.xlu0 %v220, 1
        %v334 = vpop.permute.xlu0 %333
        %335 = vrot.lane.b32.xlu0 %v209, 1
        %v336 = vpop.permute.xlu0 %335
        %337 = vrot.lane.b32.xlu0 %v221, 1
        %v338 = vpop.permute.xlu0 %337
        %v347 = vsel %vm250, %v200, %v324
        %v348 = vsel %vm250, %v218, %v326
        %v349 = vsel %vm250, %v203, %v328
        %v350 = vsel %vm250, %v219, %v330
        %v351 = vsel %vm250, %v206, %v332
        %v352 = vsel %vm250, %v220, %v334
        %v353 = vsel %vm250, %v209, %v336
        %v354 = vsel %vm250, %v221, %v338
        %s355 = scalar_lea.vmem %s153, 192 [#allocation5]
        %356 = vst.msk [vmem:[%s355] sm:$0xff] %vm259, %v347
        %357 = vst.msk [vmem:[%s355 + $0x8] sm:$0xff] %vm259, %v348
        %358 = vst.msk [vmem:[%s355 + $0x10] sm:$0xff] %vm259, %v349
        %359 = vst.msk [vmem:[%s355 + $0x18] sm:$0xff] %vm259, %v350
        %360 = vst.msk [vmem:[%s355 + $0x20] sm:$0xff] %vm259, %v351
        %361 = vst.msk [vmem:[%s355 + $0x28] sm:$0xff] %vm259, %v352
        %362 = vst.msk [vmem:[%s355 + $0x30] sm:$0xff] %vm259, %v353
        %363 = vst.msk [vmem:[%s355 + $0x38] sm:$0xff] %vm259, %v354
        %364 = vrot.lane.b32.xlu0 %v193, 127
        %v365 = vpop.permute.xlu0 %364
        %366 = vrot.lane.b32.xlu0 %v175, 127
        %v367 = vpop.permute.xlu0 %366
        %368 = vrot.lane.b32.xlu0 %v194, 127
        %v369 = vpop.permute.xlu0 %368
        %370 = vrot.lane.b32.xlu0 %v178, 127
        %v371 = vpop.permute.xlu0 %370
        %372 = vrot.lane.b32.xlu0 %v195, 127
        %v373 = vpop.permute.xlu0 %372
        %374 = vrot.lane.b32.xlu0 %v181, 127
        %v375 = vpop.permute.xlu0 %374
        %376 = vrot.lane.b32.xlu0 %v196, 127
        %v377 = vpop.permute.xlu0 %376
        %378 = vrot.lane.b32.xlu0 %v184, 127
        %v379 = vpop.permute.xlu0 %378
        %v388 = vsel %vm305, %v365, %v193
        %v389 = vsel %vm305, %v367, %v175
        %v390 = vsel %vm305, %v369, %v194
        %v391 = vsel %vm305, %v371, %v178
        %v392 = vsel %vm305, %v373, %v195
        %v393 = vsel %vm305, %v375, %v181
        %v394 = vsel %vm305, %v377, %v196
        %v395 = vsel %vm305, %v379, %v184
        %s396 = scalar_lea.vmem %s153, 256 [#allocation5]
        %397 = vst.msk [vmem:[%s396] sm:$0xff] %vm259, %v388
        %398 = vst.msk [vmem:[%s396 + $0x8] sm:$0xff] %vm259, %v389
        %399 = vst.msk [vmem:[%s396 + $0x10] sm:$0xff] %vm259, %v390
        %400 = vst.msk [vmem:[%s396 + $0x18] sm:$0xff] %vm259, %v391
        %401 = vst.msk [vmem:[%s396 + $0x20] sm:$0xff] %vm259, %v392
        %402 = vst.msk [vmem:[%s396 + $0x28] sm:$0xff] %vm259, %v393
        %403 = vst.msk [vmem:[%s396 + $0x30] sm:$0xff] %vm259, %v394
        %404 = vst.msk [vmem:[%s396 + $0x38] sm:$0xff] %vm259, %v395
        %s405 = sand.u32 %s68, 1
        %s406 = scalar_lea.sflag [#allocation4], %s405
        %s407 = sand.u32 %s68, 1
        %s408 = smul.addr %s407, 320
        %s409 = scalar_lea.vmem [#allocation5], %s408
        // Predicated region
        $region29: #{tpu_custom_call.1} parent=23 // pred_check
          %p410 = pneg %p78
        $region30: #{tpu_custom_call.1} parent=23 // pred_check_branch
          %412 = sbr.rel (%p410) target = $region32
        $region31: #{tpu_custom_call.1} parent=23 // pred_region
          %s413 = smul.u32 4, %s23
          %s415 = ssub.s32 5120, 5120
          %416 = vsyncadd %s406, %s415
          %s417 = smul.addr %s413, 2
          %s418 = smul.addr %s22, 40
          %s419 = sadd.s32 %s417, %s418
          %s420 = smul.addr %s419, 128
          %s421 = scalar_lea.hbm %s1, %s420
          %s422 = sshll.u32 %s409, 4
          %s423 = int_to_ptr.vmem [resolvable:$true] %s422
          %428 = dma.vmem_to_hbm [thread:$0]  %s423, 5120, %s421, %s406, 128, 128, 8
        $region32: #{tpu_custom_call.1} parent=23 // pred_fallthru
          _
      $region24: #{tpu_custom_call.1} parent=5 // pred_fallthru
        _
      %p429 = scmp.le.s32.totalorder 2, %s13
      // Predicated region
      $region33: #{tpu_custom_call.1} parent=5 // pred_check
        %p430 = pneg %p429
      $region34: #{tpu_custom_call.1} parent=5 // pred_check_branch
        %432 = sbr.rel (%p430) target = $region36
      $region35: #{tpu_custom_call.1} parent=5 // pred_region
        %s433 = ssub.s32 %s13, 2
        // Predicated region
        $region37: #{tpu_custom_call.1} parent=35 // pred_check
          %p434 = pneg %p84
        $region38: #{tpu_custom_call.1} parent=35 // pred_check_branch
          %436 = sbr.rel (%p434) target = $region40
        $region39: #{tpu_custom_call.1} parent=35 // pred_region
          %s437 = sand.u32 %s69, 1
          %s438 = scalar_lea.sflag [#allocation4], %s437
          %s439 = sand.u32 %s69, 1
          %s440 = smul.addr %s439, 320
          %s441 = scalar_lea.vmem [#allocation5], %s440
          %442 = dma.done %s438, 5120
        $region40: #{tpu_custom_call.1} parent=35 // pred_fallthru
          _
      $region36: #{tpu_custom_call.1} parent=5 // pred_fallthru
        _
    $region6: #{tpu_custom_call.1} parent=1 // loop_footer
      %s17 = sadd.s32 1, %s13
    $region7: #{tpu_custom_call.1} parent=1 // loop_footer_branch
      %12 = sbr.rel target = $region3
    $region8: #{tpu_custom_call.1} parent=1 // loop_exit
      _
    %443 = vsyncpa [#allocation3], 1
    %s444 = scalar_lea.sflag [#allocation3], 1
    %445 = vsyncpa %s444, 1
    %446 = vsyncpa [#allocation4], 1
    %s447 = scalar_lea.sflag [#allocation4], 1
    %448 = vsyncpa %s447, 1

</llo_original>
